<compile_context>
chip_gen: v5e
topology: v5e:2x2
jax: 0.10.0
libtpu: 0.0.40
codegen_flags: <defaults>
</compile_context>

<pallas_src>
import functools

import jax
import jax.numpy as jnp
from jax.experimental import pallas as pl
from jax.experimental.pallas import tpu as pltpu


def _round_up(n, m):
    return ((n + m - 1) // m) * m


def _mlp_kernel(x_ref, w1_ref, b1_ref, w2_ref, b2_ref, o_ref):
    x = x_ref[...]            # (tm, 3)
    w1 = w1_ref[...]          # (3, H)

    # Layer 1: (tm,3) @ (3,H)  -> 3 broadcast FMAs on the VPU (K=3 would use
    # only 3/128 of the MXU contraction dim; keep the MXU free for layer 2).
    h = (x[:, 0:1] * w1[0:1, :]
         + x[:, 1:2] * w1[1:2, :]
         + x[:, 2:3] * w1[2:3, :])
    h = h + b1_ref[...]
    h = jnp.maximum(h, 0.0)

    # Layer 2: (tm,H) @ (H,3) on the MXU, f32 accumulation.
    y = jnp.dot(h, w2_ref[...], preferred_element_type=jnp.float32)
    y = y + b2_ref[...]
    o_ref[...] = y.astype(o_ref.dtype)


def prepare_params(w1, b1, w2, b2):
    """One-time parameter prep: keep biases as 2-D (1,H)/(1,3) VMEM tiles."""
    return (w1, b1.reshape(1, -1), w2, b2.reshape(1, -1))


def sir_neural_ode_func(t, x, params, *, block_rows=512):
    """Pallas implementation of SIR_NeuralODEFunc.forward(t, x).

    t is ignored (matches the PyTorch module). x: (B, 3).
    params: output of prepare_params().
    Any stack of ODE states / solver stages can be flattened into the batch
    dimension and evaluated in this single pallas_call (weights stay resident
    in VMEM across the whole grid).
    """
    del t  # unused, matching the reference module
    w1, b1, w2, b2 = params
    B, in_dim = x.shape
    H = w1.shape[1]
    out_dim = w2.shape[1]

    if _round_up(B, 8) <= block_rows:
        # Small batch: single invocation, everything resident in VMEM, no grid.
        return pl.pallas_call(
            _mlp_kernel,
            out_shape=jax.ShapeDtypeStruct((B, out_dim), x.dtype),
            in_specs=[pl.BlockSpec(memory_space=pltpu.MemorySpace.VMEM)] * 5,
            out_specs=pl.BlockSpec(memory_space=pltpu.MemorySpace.VMEM),
        )(x, w1, b1, w2, b2)

    # Large batch (ensemble of trajectories / stacked stages): tile the batch.
    tm = block_rows
    B_pad = _round_up(B, tm)
    x_p = jnp.pad(x, ((0, B_pad - B), (0, 0))) if B_pad != B else x

    out = pl.pallas_call(
        _mlp_kernel,
        out_shape=jax.ShapeDtypeStruct((B_pad, out_dim), x.dtype),
        grid=(B_pad // tm,),
        in_specs=[
            pl.BlockSpec((tm, in_dim), lambda i: (i, 0)),
            # Constant block index: weights/biases DMA'd once, stay in VMEM.
            pl.BlockSpec((in_dim, H), lambda i: (0, 0)),
            pl.BlockSpec((1, H), lambda i: (0, 0)),
            pl.BlockSpec((H, out_dim), lambda i: (0, 0)),
            pl.BlockSpec((1, out_dim), lambda i: (0, 0)),
        ],
        out_specs=pl.BlockSpec((tm, out_dim), lambda i: (i, 0)),
        compiler_params=pltpu.CompilerParams(
            dimension_semantics=("parallel",)),
    )(x_p, w1, b1, w2, b2)
    return out[:B] if B_pad != B else out


def init_params(key, hidden_dim):
    """Deterministic PyTorch-style (uniform +-1/sqrt(fan_in)) init."""
    k1, k2, k3, k4 = jax.random.split(key, 4)
    bound1 = 1.0 / jnp.sqrt(3.0)
    bound2 = 1.0 / jnp.sqrt(float(hidden_dim))
    w1 = jax.random.uniform(k1, (3, hidden_dim), jnp.float32, -bound1, bound1)
    b1 = jax.random.uniform(k2, (hidden_dim,), jnp.float32, -bound1, bound1)
    w2 = jax.random.uniform(k3, (hidden_dim, 3), jnp.float32, -bound2, bound2)
    b2 = jax.random.uniform(k4, (3,), jnp.float32, -bound2, bound2)
    return w1, b1, w2, b2


def _reference(x, params):
    w1, b1, w2, b2 = params
    return jnp.maximum(x @ w1 + b1, 0.0) @ w2 + b2


if __name__ == "__main__":
    hidden_dim = 128
    t = jnp.float32(0.0)  # unused by forward

    key = jax.random.PRNGKey(0)
    k_x, k_x2, k_p = jax.random.split(key, 3)
    params = prepare_params(*init_params(k_p, hidden_dim))

    # 1) Small-batch single-invocation path (the module's typical call shape).
    batch = 8
    x = jax.random.normal(k_x, (batch, 3), dtype=jnp.float32)
    out = jax.block_until_ready(sir_neural_ode_func(t, x, params))
    ref = _reference(x, params)
    assert out.shape == (batch, 3)
    assert jnp.allclose(out, ref, atol=1e-5, rtol=1e-5)

    # 2) Batched-trajectories path: grid over batch tiles, weights resident,
    #    batch axis "parallel" (small tile here just to exercise the path).
    batch2 = 40
    x2 = jax.random.normal(k_x2, (batch2, 3), dtype=jnp.float32)
    out2 = jax.block_until_ready(
        sir_neural_ode_func(t, x2, params, block_rows=16))
    ref2 = _reference(x2, params)
    assert out2.shape == (batch2, 3)
    assert jnp.allclose(out2, ref2, atol=1e-5, rtol=1e-5)

    print("KERNEL_OK")
</pallas_src>

<mosaic_0001>
module attributes {stable_mosaic.version = 11 : i64} {
  func.func @_mlp_kernel(%arg0: memref<8x3xf32, #tpu.memory_space<vmem>>, %arg1: memref<3x128xf32, #tpu.memory_space<vmem>>, %arg2: memref<1x128xf32, #tpu.memory_space<vmem>>, %arg3: memref<128x3xf32, #tpu.memory_space<vmem>>, %arg4: memref<1x3xf32, #tpu.memory_space<vmem>>, %arg5: memref<8x3xf32, #tpu.memory_space<vmem>>) attributes {dimension_semantics = [], scalar_prefetch = 0 : i64, scratch_operands = 0 : i64, tpu.core_type = #tpu.core_type<tc>} {
    %c0 = arith.constant 0 : index
    %c0_0 = arith.constant 0 : index
    %0 = vector.load %arg0[%c0, %c0_0] : memref<8x3xf32, #tpu.memory_space<vmem>>, vector<8x3xf32>
    %c0_1 = arith.constant 0 : index
    %c0_2 = arith.constant 0 : index
    %1 = vector.load %arg1[%c0_1, %c0_2] : memref<3x128xf32, #tpu.memory_space<vmem>>, vector<3x128xf32>
    %2 = vector.extract_strided_slice %0 {offsets = [0, 0], sizes = [8, 1], strides = [1, 1]} : vector<8x3xf32> to vector<8x1xf32>
    %3 = vector.extract_strided_slice %1 {offsets = [0, 0], sizes = [1, 128], strides = [1, 1]} : vector<3x128xf32> to vector<1x128xf32>
    %4 = vector.broadcast %2 : vector<8x1xf32> to vector<8x128xf32>
    %5 = vector.broadcast %3 : vector<1x128xf32> to vector<8x128xf32>
    %6 = arith.mulf %4, %5 : vector<8x128xf32>
    %7 = vector.extract_strided_slice %0 {offsets = [0, 1], sizes = [8, 1], strides = [1, 1]} : vector<8x3xf32> to vector<8x1xf32>
    %8 = vector.extract_strided_slice %1 {offsets = [1, 0], sizes = [1, 128], strides = [1, 1]} : vector<3x128xf32> to vector<1x128xf32>
    %9 = vector.broadcast %7 : vector<8x1xf32> to vector<8x128xf32>
    %10 = vector.broadcast %8 : vector<1x128xf32> to vector<8x128xf32>
    %11 = arith.mulf %9, %10 : vector<8x128xf32>
    %12 = arith.addf %6, %11 : vector<8x128xf32>
    %13 = vector.extract_strided_slice %0 {offsets = [0, 2], sizes = [8, 1], strides = [1, 1]} : vector<8x3xf32> to vector<8x1xf32>
    %14 = vector.extract_strided_slice %1 {offsets = [2, 0], sizes = [1, 128], strides = [1, 1]} : vector<3x128xf32> to vector<1x128xf32>
    %15 = vector.broadcast %13 : vector<8x1xf32> to vector<8x128xf32>
    %16 = vector.broadcast %14 : vector<1x128xf32> to vector<8x128xf32>
    %17 = arith.mulf %15, %16 : vector<8x128xf32>
    %18 = arith.addf %12, %17 : vector<8x128xf32>
    %c0_3 = arith.constant 0 : index
    %c0_4 = arith.constant 0 : index
    %19 = vector.load %arg2[%c0_3, %c0_4] : memref<1x128xf32, #tpu.memory_space<vmem>>, vector<1x128xf32>
    %20 = vector.broadcast %19 : vector<1x128xf32> to vector<8x128xf32>
    %21 = arith.addf %18, %20 : vector<8x128xf32>
    %cst = arith.constant 0.000000e+00 : f32
    %22 = vector.broadcast %cst : f32 to vector<8x128xf32>
    %23 = arith.maximumf %21, %22 : vector<8x128xf32>
    %c0_5 = arith.constant 0 : index
    %c0_6 = arith.constant 0 : index
    %24 = vector.load %arg3[%c0_5, %c0_6] : memref<128x3xf32, #tpu.memory_space<vmem>>, vector<128x3xf32>
    %cst_7 = arith.constant dense<0.000000e+00> : vector<8x3xf32>
    %25 = tpu.matmul %23, %24, %cst_7 {dimension_numbers = #tpu.dot_dimension_numbers<[1], [0], [0], [1], [0, 0, 1, 1], [], []>} : vector<8x128xf32>, vector<128x3xf32>, vector<8x3xf32> -> vector<8x3xf32>
    %c0_8 = arith.constant 0 : index
    %c0_9 = arith.constant 0 : index
    %26 = vector.load %arg4[%c0_8, %c0_9] : memref<1x3xf32, #tpu.memory_space<vmem>>, vector<1x3xf32>
    %27 = vector.broadcast %26 : vector<1x3xf32> to vector<8x3xf32>
    %28 = arith.addf %25, %27 : vector<8x3xf32>
    %c0_10 = arith.constant 0 : index
    %c0_11 = arith.constant 0 : index
    %29 = vector.load %arg5[%c0_10, %c0_11] : memref<8x3xf32, #tpu.memory_space<vmem>>, vector<8x3xf32>
    tpu.vector_store %arg5[%c0_10, %c0_11], %28 {strides = array<i32>} : memref<8x3xf32, #tpu.memory_space<vmem>>, vector<8x3xf32>,
    return
  }
}

</mosaic_0001>

<llo_original>
// kernel: tpu_custom_call.1
$region0: #{tpu_custom_call.1}
  #allocation0 [shape = 'u32[]', space=smem, size = 0x4, offset = 0x4, fixed_abs, tag = 'smem constant byte address 0x4 - core index']
  #allocation1 [shape = 'u32[72,128]{1,0:T(1,128)}', space=vmem, size = 0x9000, scoped, tag = 'internal scratch']
  %s0 = inlined_call_operand.vmem [shape: f32[8,3], index: 0, kind: input, shape index: {}]
  %s1 = inlined_call_operand.vmem [shape: f32[3,128], index: 1, kind: input, shape index: {}]
  %s2 = inlined_call_operand.vmem [shape: f32[1,128], index: 2, kind: input, shape index: {}]
  %s3 = inlined_call_operand.vmem [shape: f32[128,3], index: 3, kind: input, shape index: {}]
  %s4 = inlined_call_operand.vmem [shape: f32[1,3], index: 4, kind: input, shape index: {}]
  %s5 = inlined_call_operand.vmem [shape: f32[8,3], index: 5, kind: output, shape index: {}]
  %s6 = sld [smem:[#allocation0]]
  $region30: #{tpu_custom_call.1} parent=0
    _
  %s8 = ssub.s32 1, %s6
  %s9 = scalar_select 0, %s8, %s6
  // Predicated region
  $region2: #{tpu_custom_call.1} parent=0 // pred_check
    _
  $region3: #{tpu_custom_call.1} parent=0 // pred_check_branch
    %11 = sbr.rel (0) target = $region5
  $region4: #{tpu_custom_call.1} parent=0 // pred_region
    _
  $region5: #{tpu_custom_call.1} parent=0 // pred_fallthru
    _
  // Predicated region
  $region6: #{tpu_custom_call.1} parent=0 // pred_check
    _
  $region7: #{tpu_custom_call.1} parent=0 // pred_check_branch
    %13 = sbr.rel (0) target = $region9
  $region8: #{tpu_custom_call.1} parent=0 // pred_region
    _
  $region9: #{tpu_custom_call.1} parent=0 // pred_fallthru
    _
  // Predicated region
  $region10: #{tpu_custom_call.1} parent=0 // pred_check
    _
  $region11: #{tpu_custom_call.1} parent=0 // pred_check_branch
    %15 = sbr.rel (0) target = $region13
  $region12: #{tpu_custom_call.1} parent=0 // pred_region
    _
  $region13: #{tpu_custom_call.1} parent=0 // pred_fallthru
    _
  // Predicated region
  $region14: #{tpu_custom_call.1} parent=0 // pred_check
    _
  $region15: #{tpu_custom_call.1} parent=0 // pred_check_branch
    %17 = sbr.rel (0) target = $region17
  $region16: #{tpu_custom_call.1} parent=0 // pred_region
    _
  $region17: #{tpu_custom_call.1} parent=0 // pred_fallthru
    _
  // Predicated region
  $region18: #{tpu_custom_call.1} parent=0 // pred_check
    _
  $region19: #{tpu_custom_call.1} parent=0 // pred_check_branch
    %19 = sbr.rel (0) target = $region21
  $region20: #{tpu_custom_call.1} parent=0 // pred_region
    _
  $region21: #{tpu_custom_call.1} parent=0 // pred_fallthru
    _
  %v20 = vld [vmem:[%s0] sm:$0xff]
  %v21 = vld [vmem:[%s1] sm:$0x7]
  %23 = vset.pattern.permute.xlu0 0
  %24 = vperm.xlu0 %23, %v20
  %v25 = vpop.permute.xlu0 %24
  %v27 = vperm.slane %v21, 0
  %v28 = vmul.f32 %v25, %v27
  %29 = vset.pattern.permute.xlu0 1
  %30 = vperm.xlu0 %29, %v20
  %v31 = vpop.permute.xlu0 %30
  %v33 = vperm.slane %v21, 1
  %v34 = vmul.f32 %v31, %v33
  %v35 = vadd.f32 %v28, %v34
  %36 = vset.pattern.permute.xlu0 2
  %37 = vperm.xlu0 %36, %v20
  %v38 = vpop.permute.xlu0 %37
  %v40 = vperm.slane %v21, 2
  %v41 = vmul.f32 %v38, %v40
  %v42 = vadd.f32 %v35, %v41
  %v43 = vld [vmem:[%s2] sm:$0x1]
  %v45 = vperm.slane %v43, 0
  %v47 = vadd.f32 %v42, %v45
  %v48 = vmax.f32 %v47, 0.0
  %v49 = vld [vmem:[%s3] sm:$0xff]
  %v50 = vld [vmem:[%s3 + $0x8] sm:$0xff]
  %v51 = vld [vmem:[%s3 + $0x10] sm:$0xff]
  %v52 = vld [vmem:[%s3 + $0x18] sm:$0xff]
  %v53 = vld [vmem:[%s3 + $0x20] sm:$0xff]
  %v54 = vld [vmem:[%s3 + $0x28] sm:$0xff]
  %v55 = vld [vmem:[%s3 + $0x30] sm:$0xff]
  %v56 = vld [vmem:[%s3 + $0x38] sm:$0xff]
  %v57 = vld [vmem:[%s3 + $0x40] sm:$0xff]
  %v58 = vld [vmem:[%s3 + $0x48] sm:$0xff]
  %v59 = vld [vmem:[%s3 + $0x50] sm:$0xff]
  %v60 = vld [vmem:[%s3 + $0x58] sm:$0xff]
  %v61 = vld [vmem:[%s3 + $0x60] sm:$0xff]
  %v62 = vld [vmem:[%s3 + $0x68] sm:$0xff]
  %v63 = vld [vmem:[%s3 + $0x70] sm:$0xff]
  %v64 = vld [vmem:[%s3 + $0x78] sm:$0xff]
  %v65 = vld [vmem:[%s4] sm:$0x1]
  %v67 = vperm.slane %v65, 0
  %69 = vmatpush.msra.mxu0 %v64
  %70 = vmatpush.msra.mxu0 %v63
  %71 = vmatpush.msra.mxu0 %v62
  %72 = vmatpush.msra.mxu0 %v61
  %73 = vmatpush.msra.mxu0 %v60
  %74 = vmatpush.msra.mxu0 %v59
  %75 = vmatpush.msra.mxu0 %v58
  %76 = vmatpush.msra.mxu0 %v57
  %77 = vmatpush.msra.mxu0 %v56
  %78 = vmatpush.msra.mxu0 %v55
  %79 = vmatpush.msra.mxu0 %v54
  %80 = vmatpush.msra.mxu0 %v53
  %81 = vmatpush.msra.mxu0 %v52
  %82 = vmatpush.msra.mxu0 %v51
  %83 = vmatpush.msra.mxu0 %v50
  %84 = vmatpush.msra.mxu0 %v49
  %85 = vmatmul.f32.gmra.mxu0 %v48
  %v86 = vpop.f32.mrf.mxu0
  %v87 = vadd.f32 %v67, %v86
  %88 = vdwg.mxu0
  %vm89 = vcmask 23552
  %90 = vst.msk [vmem:[%s5] sm:$0xff] %vm89, %v87
  // Predicated region
  $region22: #{tpu_custom_call.1} parent=0 // pred_check
    _
  $region23: #{tpu_custom_call.1} parent=0 // pred_check_branch
    %92 = sbr.rel (0) target = $region25
  $region24: #{tpu_custom_call.1} parent=0 // pred_region
    _
  $region25: #{tpu_custom_call.1} parent=0 // pred_fallthru
    _
  // Predicated region
  $region26: #{tpu_custom_call.1} parent=0 // pred_check
    _
  $region27: #{tpu_custom_call.1} parent=0 // pred_check_branch
    %94 = sbr.rel (0) target = $region29
  $region28: #{tpu_custom_call.1} parent=0 // pred_region
    _
  $region29: #{tpu_custom_call.1} parent=0 // pred_fallthru
    _

</llo_original>
